<compile_context>
chip_gen: v6e
topology: v6e:2x2x1
jax: 0.10.0
libtpu: 0.0.40
codegen_flags: <defaults>
</compile_context>

<pallas_src>
import functools

import jax
import jax.numpy as jnp
from jax.experimental import pallas as pl
from jax.experimental.pallas import tpu as pltpu


def _make_abc_kernel(dx: float, tr: int, n: int, rows: int):
    """Per-tile kernel: partial trapezoid area of |y_pred - y_true|."""
    dx = float(dx)
    needs_mask = (rows % tr) != 0  # only the ragged last tile needs masking

    def kernel(yt_ref, yp_ref, o_ref):
        # Stream in native dtype; do the math in f32.
        d = jnp.abs(yp_ref[...].astype(jnp.float32) - yt_ref[...].astype(jnp.float32))

        if needs_mask:
            # Zero rows past the true row count (OOB block reads are undefined;
            # the select discards them).  Cheap: one VPU select per vreg.
            row_ids = pl.program_id(0) * tr + jax.lax.broadcasted_iota(
                jnp.int32, (tr, 1), 0
            )
            d = jnp.where(row_ids < rows, d, 0.0)

        # Fold sublane groups on the VPU: (tr, n) -> (8, n).  Keeps the hot loop
        # off the XLU (only the tiny reduce below uses it).
        part = jnp.sum(d.reshape(tr // 8, 8, n), axis=0)

        # trapz(row) = dx * (sum(row) - 0.5*(row[0] + row[-1]))  (uniform dx).
        # Endpoint terms add linearly over rows, so correcting the folded
        # partial once per tile is exact.  (n == 1 correctly yields 0.)
        total = jnp.sum(part, keepdims=True)                              # (1, 1)
        ends = jnp.sum(part[:, 0:1] + part[:, n - 1:n], keepdims=True)    # (1, 1)
        o_ref[...] = dx * (total - 0.5 * ends)

    return kernel


@functools.partial(jax.jit, static_argnames=("dx", "dim", "block_rows"))
def area_between_curves_loss(y_true, y_pred, dx=1.0, dim=-1, block_rows=None):
    """Pallas-backed equivalent of AreaBetweenCurvesLoss(dx, dim, on_reduce=True)."""
    y_true = jnp.asarray(y_true)
    y_pred = jnp.asarray(y_pred)
    assert y_true.shape == y_pred.shape

    # Common dtype (torch's subtraction promotes); keep native dtype in HBM.
    dt = jnp.promote_types(y_true.dtype, y_pred.dtype)
    y_true = y_true.astype(dt)
    y_pred = y_pred.astype(dt)

    # Move the integration axis last, flatten leading dims into "rows".
    y_true = jnp.moveaxis(y_true, dim, -1)
    y_pred = jnp.moveaxis(y_pred, dim, -1)
    n = y_true.shape[-1]
    yt2 = y_true.reshape(-1, n)
    yp2 = y_pred.reshape(-1, n)
    rows = yt2.shape[0]

    itemsize = jnp.dtype(dt).itemsize
    # Native sublane tile: 8 for f32, 16 for bf16, 32 for int8/fp8.
    sub = max(8, 32 // itemsize)

    # Tile sizing: ~4 MiB per input tile => 2 inputs x 2 pipeline buffers = 16 MiB
    # of VMEM; amortizes the ~0.35 us per-grid-step overhead and stays well under
    # v7x's 64 MiB physical / 48 MiB scoped VMEM (v5e/v6e have more headroom).
    tile_bytes = 4 * 1024 * 1024
    tr = max(sub, (tile_bytes // max(1, n * itemsize)) // sub * sub)
    rows_ceil = ((rows + sub - 1) // sub) * sub
    tr = min(tr, rows_ceil)
    if block_rows is not None:  # optional override (testing / tuning)
        tr = min(tr, max(sub, (int(block_rows) // sub) * sub))
    num_tiles = pl.cdiv(rows, tr)
    # TODO(synk): for very long curves (n*itemsize*sub beyond the VMEM budget) add a
    # second "arbitrary" grid axis over n in lane chunks, applying the endpoint
    # correction only on the first/last chunk.

    partials = pl.pallas_call(
        _make_abc_kernel(float(dx), tr, n, rows),
        out_shape=jax.ShapeDtypeStruct((num_tiles, 1), jnp.float32),
        grid=(num_tiles,),
        in_specs=[
            pl.BlockSpec((tr, n), lambda i: (i, 0)),
            pl.BlockSpec((tr, n), lambda i: (i, 0)),
        ],
        out_specs=pl.BlockSpec((1, 1), lambda i: (i, 0)),
        compiler_params=pltpu.CompilerParams(
            # Independent per-tile partial sums: "parallel" lets v7x shard the
            # streaming loop across both TensorCores (no shared-accumulator race).
            dimension_semantics=("parallel",),
            vmem_limit_bytes=48 * 1024 * 1024,
        ),
    )(yt2, yp2)

    # Final combine in the wrapper: mean over the *true* row count
    # (masked / out-of-range rows contribute 0 to the partial sums).
    return jnp.sum(partials) / rows


def _reference(y_true, y_pred, dx, dim=-1):
    d = jnp.abs(jnp.asarray(y_pred, jnp.float32) - jnp.asarray(y_true, jnp.float32))
    d = jnp.moveaxis(d, dim, -1)
    rows = dx * (jnp.sum(d, axis=-1) - 0.5 * (d[..., 0] + d[..., -1]))
    return jnp.mean(rows)


if __name__ == "__main__":
    key = jax.random.PRNGKey(0)
    k1, k2, k3, k4, k5, k6 = jax.random.split(key, 6)

    # Case 1: batch=2, channels=4, seq=128 -> 8 rows of 128 points, single tile.
    shape1 = (2, 4, 128)
    yt1 = jax.random.normal(k1, shape1, dtype=jnp.float32)
    yp1 = jax.random.normal(k2, shape1, dtype=jnp.float32)
    dx1 = 0.5
    res1 = jax.block_until_ready(area_between_curves_loss(yt1, yp1, dx=dx1, dim=-1))
    ref1 = _reference(yt1, yp1, dx1)
    assert jnp.allclose(res1, ref1, rtol=1e-5, atol=1e-5), (res1, ref1)

    # Case 2: 15 rows of 64 points with block_rows=8 -> two tiles; exercises the
    # per-block partial-sum path and in-kernel masking of the ragged last tile.
    shape2 = (3, 5, 64)
    yt2 = jax.random.normal(k3, shape2, dtype=jnp.float32)
    yp2 = jax.random.normal(k4, shape2, dtype=jnp.float32)
    dx2 = 1.0
    res2 = jax.block_until_ready(
        area_between_curves_loss(yt2, yp2, dx=dx2, dim=-1, block_rows=8)
    )
    ref2 = _reference(yt2, yp2, dx2)
    assert jnp.allclose(res2, ref2, rtol=1e-5, atol=1e-5), (res2, ref2)

    # Case 3: bf16 inputs (sublane tile 16) + ragged rows; math done in f32.
    shape3 = (2, 3, 256)
    yt3 = jax.random.normal(k5, shape3, dtype=jnp.bfloat16)
    yp3 = jax.random.normal(k6, shape3, dtype=jnp.bfloat16)
    dx3 = 0.25
    res3 = jax.block_until_ready(area_between_curves_loss(yt3, yp3, dx=dx3, dim=-1))
    ref3 = _reference(yt3, yp3, dx3)
    assert jnp.allclose(res3, ref3, rtol=1e-3, atol=1e-3), (res3, ref3)

    print("KERNEL_OK")
</pallas_src>

<mosaic_0001>
module attributes {stable_mosaic.version = 11 : i64} {
  func.func @kernel(%arg0: i32, %arg1: memref<8x128xf32, #tpu.memory_space<vmem>>, %arg2: memref<8x128xf32, #tpu.memory_space<vmem>>, %arg3: memref<1x1xf32, #tpu.memory_space<vmem>>) attributes {dimension_semantics = [#tpu.dimension_semantics<parallel>], iteration_bounds = array<i64: 1>, scalar_prefetch = 0 : i64, scratch_operands = 0 : i64, tpu.core_type = #tpu.core_type<tc>, window_params = [{transform_indices = @transform_0, window_bounds = array<i64: 8, 128>}, {transform_indices = @transform_1, window_bounds = array<i64: 8, 128>}, {transform_indices = @transform_2, window_bounds = array<i64: 1, 1>}]} {
    %c0 = arith.constant 0 : index
    %c0_0 = arith.constant 0 : index
    %0 = vector.load %arg2[%c0, %c0_0] : memref<8x128xf32, #tpu.memory_space<vmem>>, vector<8x128xf32>
    %c0_1 = arith.constant 0 : index
    %c0_2 = arith.constant 0 : index
    %1 = vector.load %arg1[%c0_1, %c0_2] : memref<8x128xf32, #tpu.memory_space<vmem>>, vector<8x128xf32>
    %2 = arith.subf %0, %1 : vector<8x128xf32>
    %3 = math.absf %2 : vector<8x128xf32>
    %4 = vector.shape_cast %3 : vector<8x128xf32> to vector<1x8x128xf32>
    %cst = arith.constant dense<0.000000e+00> : vector<8x128xf32>
    %5 = vector.multi_reduction <add>, %4, %cst [0] : vector<1x8x128xf32> to vector<8x128xf32>
    %6 = vector.shape_cast %5 : vector<8x128xf32> to vector<1x8x128xf32>
    %cst_3 = arith.constant dense<0.000000e+00> : vector<1xf32>
    %7 = vector.multi_reduction <add>, %6, %cst_3 [1, 2] : vector<1x8x128xf32> to vector<1xf32>
    %8 = vector.shape_cast %7 : vector<1xf32> to vector<1x1x1xf32>
    %9 = vector.extract %8[0, 0, 0] : f32 from vector<1x1x1xf32>
    %10 = vector.broadcast %9 : f32 to vector<1x1xf32>
    %11 = vector.extract_strided_slice %5 {offsets = [0, 0], sizes = [8, 1], strides = [1, 1]} : vector<8x128xf32> to vector<8x1xf32>
    %12 = vector.extract_strided_slice %5 {offsets = [0, 127], sizes = [8, 1], strides = [1, 1]} : vector<8x128xf32> to vector<8x1xf32>
    %13 = arith.addf %11, %12 : vector<8x1xf32>
    %14 = vector.shape_cast %13 : vector<8x1xf32> to vector<1x8x1xf32>
    %cst_4 = arith.constant dense<0.000000e+00> : vector<1xf32>
    %15 = vector.multi_reduction <add>, %14, %cst_4 [1, 2] : vector<1x8x1xf32> to vector<1xf32>
    %16 = vector.shape_cast %15 : vector<1xf32> to vector<1x1x1xf32>
    %17 = vector.extract %16[0, 0, 0] : f32 from vector<1x1x1xf32>
    %18 = vector.broadcast %17 : f32 to vector<1x1xf32>
    %cst_5 = arith.constant 5.000000e-01 : f32
    %19 = vector.broadcast %cst_5 : f32 to vector<1x1xf32>
    %20 = arith.mulf %19, %18 : vector<1x1xf32>
    %21 = arith.subf %10, %20 : vector<1x1xf32>
    %cst_6 = arith.constant 5.000000e-01 : f32
    %22 = vector.broadcast %cst_6 : f32 to vector<1x1xf32>
    %23 = arith.mulf %22, %21 : vector<1x1xf32>
    %c0_7 = arith.constant 0 : index
    %c0_8 = arith.constant 0 : index
    %24 = vector.load %arg3[%c0_7, %c0_8] : memref<1x1xf32, #tpu.memory_space<vmem>>, vector<1x1xf32>
    tpu.vector_store %arg3[%c0_7, %c0_8], %23 {strides = array<i32>} : memref<1x1xf32, #tpu.memory_space<vmem>>, vector<1x1xf32>,
    return
  }
  func.func @transform_0(%arg0: i32) -> (i32, i32) {
    %c0_i32 = arith.constant 0 : i32
    %c0_i32_0 = arith.constant 0 : i32
    return %arg0, %c0_i32 : i32, i32
  }
  func.func @transform_1(%arg0: i32) -> (i32, i32) {
    %c0_i32 = arith.constant 0 : i32
    %c0_i32_0 = arith.constant 0 : i32
    return %arg0, %c0_i32 : i32, i32
  }
  func.func @transform_2(%arg0: i32) -> (i32, i32) {
    %c0_i32 = arith.constant 0 : i32
    %c0_i32_0 = arith.constant 0 : i32
    return %arg0, %c0_i32 : i32, i32
  }
}

</mosaic_0001>

<llo_original>
// kernel: area_between_curves_loss.1
$region0: #{area_between_curves_loss.1}
  #allocation0 [shape = 'u32[]', space=smem, size = 0x4, offset = 0x4, fixed_abs, tag = 'smem constant byte address 0x4 - core index']
  #allocation1 [shape = 'u32[144,128]{1,0:T(1,128)}', space=vmem, size = 0x12000, scoped, tag = 'internal scratch']
  %s0 = inlined_call_operand.hbm [shape: f32[8,128], index: 0, kind: input, shape index: {}]
  %s1 = inlined_call_operand.hbm [shape: f32[8,128], index: 1, kind: input, shape index: {}]
  %s2 = inlined_call_operand.hbm [shape: f32[1,1], index: 2, kind: output, shape index: {}]
  %s3 = sld [smem:[#allocation0]]
  $region26: #{area_between_curves_loss.1} parent=0
    _
  %s5 = ssub.s32 1, %s3
  %s6 = scalar_select 0, %s5, %s3
  $region1: #{area_between_curves_loss.1} parent=0
    #allocation2 [shape = 'u8[4096]{0}', space=vmem, size = 0x1000, scoped, tag = 'input window, operand 0, single buffered']
    #allocation3 [shape = 's32[1]{0}', space=sflag, size = 0x4, scoped, tag = 'scoped memory for area_between_curves_loss.1']
    #allocation4 [shape = 's32[1]{0}', space=sflag, size = 0x4, scoped, tag = 'scoped memory for area_between_curves_loss.1']
    #allocation5 [shape = 'u8[4096]{0}', space=vmem, size = 0x1000, scoped, tag = 'input window, operand 1, single buffered']
    #allocation6 [shape = 's32[1]{0}', space=sflag, size = 0x4, scoped, tag = 'scoped memory for area_between_curves_loss.1']
    #allocation7 [shape = 'u8[512]{0}', space=vmem, size = 0x400, scoped, tag = 'output window, operand 0, single buffered']
    %7 = vsyncpa [#allocation3], 0
    %8 = vsyncpa [#allocation6], 0
    %9 = vsyncpa [#allocation4], 0
    // Predicated region
    $region2: #{area_between_curves_loss.1} parent=1 // pred_check
      _
    $region3: #{area_between_curves_loss.1} parent=1 // pred_check_branch
      %11 = sbr.rel (0) target = $region5
    $region4: #{area_between_curves_loss.1} parent=1 // pred_region
      %s13 = ssub.s32 128, 128
      %14 = vsyncadd [#allocation3], %s13
      %s16 = sshll.u32 [#allocation2], 4
      %s17 = int_to_ptr.vmem [resolvable:$true] %s16
      %19 = dma.hbm_to_vmem [thread:$0]  %s0, 128, %s17, [#allocation3]
    $region5: #{area_between_curves_loss.1} parent=1 // pred_fallthru
      _
    // Predicated region
    $region6: #{area_between_curves_loss.1} parent=1 // pred_check
      _
    $region7: #{area_between_curves_loss.1} parent=1 // pred_check_branch
      %21 = sbr.rel (0) target = $region9
    $region8: #{area_between_curves_loss.1} parent=1 // pred_region
      %s23 = ssub.s32 128, 128
      %24 = vsyncadd [#allocation6], %s23
      %s26 = sshll.u32 [#allocation5], 4
      %s27 = int_to_ptr.vmem [resolvable:$true] %s26
      %29 = dma.hbm_to_vmem [thread:$0]  %s1, 128, %s27, [#allocation6]
    $region9: #{area_between_curves_loss.1} parent=1 // pred_fallthru
      _
    // Predicated region
    $region10: #{area_between_curves_loss.1} parent=1 // pred_check
      _
    $region11: #{area_between_curves_loss.1} parent=1 // pred_check_branch
      %31 = sbr.rel (0) target = $region13
    $region12: #{area_between_curves_loss.1} parent=1 // pred_region
      %32 = dma.done [#allocation3], 128
    $region13: #{area_between_curves_loss.1} parent=1 // pred_fallthru
      _
    // Predicated region
    $region14: #{area_between_curves_loss.1} parent=1 // pred_check
      _
    $region15: #{area_between_curves_loss.1} parent=1 // pred_check_branch
      %34 = sbr.rel (0) target = $region17
    $region16: #{area_between_curves_loss.1} parent=1 // pred_region
      %35 = dma.done [#allocation6], 128
    $region17: #{area_between_curves_loss.1} parent=1 // pred_fallthru
      _
    %v36 = vld [vmem:[#allocation5] sm:$0xff]
    %v37 = vld [vmem:[#allocation2] sm:$0xff]
    %v38 = vsub.f32 %v36, %v37
    %v39 = vand.u32 2147483647, %v38
    %v40 = vadd.f32 %v39, 0.0
    %41 = vadd.xlane.f32.xlu0 %v40
    %v42 = vpop.xlane.xlu0 %41
    %v43 = vrot.slane %v42, 4
    %v44 = vadd.f32 %v42, %v43
    %v45 = vrot.slane %v44, 2
    %v46 = vadd.f32 %v44, %v45
    %v47 = vrot.slane %v46, 1
    %v48 = vadd.f32 %v46, %v47
    %s49 = vtos %v48
    %v50 = vstv %s49
    %52 = vrot.lane.b32.xlu0 %v40, 1
    %v53 = vpop.permute.xlu0 %52
    %v55 = vadd.f32 %v40, %v53
    %vm56 = vcmask 7168
    %v57 = vsel %vm56, %v55, 0.0
    %58 = vadd.xlane.f32.xlu0 %v57
    %v59 = vpop.xlane.xlu0 %58
    %v60 = vrot.slane %v59, 4
    %v61 = vadd.f32 %v59, %v60
    %v62 = vrot.slane %v61, 2
    %v63 = vadd.f32 %v61, %v62
    %v64 = vrot.slane %v63, 1
    %v65 = vadd.f32 %v63, %v64
    %s66 = vtos %v65
    %v67 = vstv %s66
    %v68 = vmul.f32 %v67, 0.5
    %v69 = vsub.f32 %v50, %v68
    %v70 = vmul.f32 %v69, 0.5
    %vm71 = vcmask 0
    %72 = vst.msk [vmem:[#allocation7] sm:$0x1] %vm71, %v70
    // Predicated region
    $region18: #{area_between_curves_loss.1} parent=1 // pred_check
      _
    $region19: #{area_between_curves_loss.1} parent=1 // pred_check_branch
      %74 = sbr.rel (0) target = $region21
    $region20: #{area_between_curves_loss.1} parent=1 // pred_region
      %s76 = ssub.s32 16, 16
      %77 = vsyncadd [#allocation4], %s76
      %s79 = sshll.u32 [#allocation7], 4
      %s80 = int_to_ptr.vmem [resolvable:$true] %s79
      %82 = dma.vmem_to_hbm [thread:$0]  %s80, 16, %s2, [#allocation4]
    $region21: #{area_between_curves_loss.1} parent=1 // pred_fallthru
      _
    // Predicated region
    $region22: #{area_between_curves_loss.1} parent=1 // pred_check
      _
    $region23: #{area_between_curves_loss.1} parent=1 // pred_check_branch
      %84 = sbr.rel (0) target = $region25
    $region24: #{area_between_curves_loss.1} parent=1 // pred_region
      %85 = dma.done [#allocation4], 16
    $region25: #{area_between_curves_loss.1} parent=1 // pred_fallthru
      _
    %86 = vsyncpa [#allocation3], 1
    %87 = vsyncpa [#allocation6], 1
    %88 = vsyncpa [#allocation4], 1

</llo_original>
